<compile_context>
chip_gen: v7x
topology: tpu7x:2x2x1
jax: 0.10.0
libtpu: 0.0.40
codegen_flags: <defaults>
</compile_context>

<pallas_src>
import functools

import jax
import jax.numpy as jnp
from jax.experimental import pallas as pl
from jax.experimental.pallas import tpu as pltpu

NEG_INF = -1e30          # additive mask for "no edge"
M_CLAMP = -1e4           # clamp on the running max used for exp(); guarantees
                         # fully-masked src tiles contribute exactly 0 (no garbage
                         # accumulation / overflow before the first real entry).
LEAKY_SLOPE = 0.2
LANE = 128               # all feature slabs are padded to 128 lanes (lane-dense)


def _round_up(a, b):
    return (a + b - 1) // b * b


# ----------------------------------------------------------------------------
# Kernel 1: initial projection   P = x_pad @ Wcat   (one MXU matmul per row tile)
# ----------------------------------------------------------------------------
def _proj_kernel(x_ref, w_ref, out_ref, *, mm_dtype):
    out_ref[...] = jnp.dot(x_ref[...].astype(mm_dtype),
                           w_ref[...].astype(mm_dtype),
                           preferred_element_type=jnp.float32)


def _proj_call(x_pad, wcat, tile, mm_dtype):
    n_pad = x_pad.shape[0]
    grid = (n_pad // tile,)
    flops = 2 * n_pad * LANE * LANE
    bytes_accessed = (x_pad.size + wcat.size + n_pad * LANE) * 4
    return pl.pallas_call(
        functools.partial(_proj_kernel, mm_dtype=mm_dtype),
        out_shape=jax.ShapeDtypeStruct((n_pad, LANE), jnp.float32),
        grid_spec=pltpu.PrefetchScalarGridSpec(
            num_scalar_prefetch=0,
            grid=grid,
            in_specs=[pl.BlockSpec((tile, LANE), lambda i: (i, 0)),
                      pl.BlockSpec((LANE, LANE), lambda i: (0, 0))],
            out_specs=pl.BlockSpec((tile, LANE), lambda i: (i, 0))),
        compiler_params=pltpu.CompilerParams(
            dimension_semantics=("parallel",),
            vmem_limit_bytes=32 << 20),
        cost_estimate=pl.CostEstimate(flops=int(flops), transcendentals=0,
                                      bytes_accessed=int(bytes_accessed)),
    )(x_pad, wcat)


# ----------------------------------------------------------------------------
# Kernel 2: one GATConv layer, flash-style online softmax over src tiles.
# Inputs P hold [xw | alpha_src | alpha_dst] in a 128-lane padded slab.
# Output is either the padded activation (final layer) or, fused, the next
# layer's projection  relu(y) @ Wcat_next.
# ----------------------------------------------------------------------------
def _make_attn_kernel(*, heads, cdim, concat, apply_relu, has_wnext, mm_dtype,
                      exact_recip):
    hc = heads * cdim

    def kernel(p_dst_ref, p_src_ref, mask_ref, bias_ref, *rest):
        if has_wnext:
            wnext_ref, out_ref, m_sc, l_sc, acc_sc = rest
        else:
            out_ref, m_sc, l_sc, acc_sc = rest
            wnext_ref = None

        j = pl.program_id(1)

        @pl.when(j == 0)
        def _():
            m_sc[...] = jnp.full_like(m_sc, NEG_INF)
            l_sc[...] = jnp.zeros_like(l_sc)
            acc_sc[...] = jnp.zeros_like(acc_sc)

        p_src = p_src_ref[...]                                   # (TS, 128) f32
        xw_src = p_src[:, :hc].astype(mm_dtype)                  # cast once, all heads
        a_src_t = p_src[:, hc:hc + heads].T                      # (heads, TS): one XLU transpose
        a_dst = p_dst_ref[:, hc + heads:hc + 2 * heads]          # (TD, heads)
        mask = mask_ref[...].astype(jnp.float32)                 # bf16 -> f32 upcast

        for h in range(heads):                                   # static, small head count
            e = a_dst[:, h:h + 1] + a_src_t[h:h + 1, :]          # (TD, TS)
            e = jnp.where(e >= 0, e, LEAKY_SLOPE * e)            # LeakyReLU(0.2)
            e = e + mask                                         # + log(mult) / -1e30

            m_old = m_sc[:, h:h + 1]
            m_new = jnp.maximum(m_old, jnp.max(e, axis=-1, keepdims=True))
            m_use = jnp.maximum(m_new, M_CLAMP)                  # fully-masked tile -> p == 0
            scale = jnp.exp(m_old - m_new)                       # <= 1, EUP
            p = jnp.exp(e - m_use)                               # masked entries underflow to 0

            l_sc[:, h:h + 1] = scale * l_sc[:, h:h + 1] + jnp.sum(p, -1, keepdims=True)
            acc_sc[h, :, :] = scale * acc_sc[h, :, :] + jnp.dot(
                p.astype(mm_dtype), xw_src[:, h * cdim:(h + 1) * cdim],
                preferred_element_type=jnp.float32)
            m_sc[:, h:h + 1] = m_new

        @pl.when(j == pl.num_programs(1) - 1)
        def _():
            cols = []
            for h in range(heads):
                inv = pl.reciprocal(l_sc[:, h:h + 1], approx=not exact_recip)
                cols.append(acc_sc[h, :, :] * inv)               # (TD, C)
            if concat:
                y = cols[0] if heads == 1 else jnp.concatenate(cols, axis=-1)
            else:
                y = cols[0]
                for o in cols[1:]:
                    y = y + o
                y = y * (1.0 / heads)
            width = y.shape[-1]
            if width < LANE:                                     # lane-dense padded slab
                y = jnp.concatenate(
                    [y, jnp.zeros((y.shape[0], LANE - width), jnp.float32)], axis=-1)
            y = y + bias_ref[...]
            if apply_relu:
                y = jnp.maximum(y, 0.0)
            if has_wnext:                                        # fuse next layer's projection
                y = jnp.dot(y.astype(mm_dtype), wnext_ref[...].astype(mm_dtype),
                            preferred_element_type=jnp.float32)
            out_ref[...] = y                                     # unmasked 128-lane store

    return kernel


def _attn_call(p, mask_bf16, bias_pad, wnext, *, heads, cdim, concat, apply_relu,
               tile, mm_dtype, exact_recip):
    n_pad = p.shape[0]
    grid = (n_pad // tile, n_pad // tile)
    has_wnext = wnext is not None

    kernel = _make_attn_kernel(heads=heads, cdim=cdim, concat=concat,
                               apply_relu=apply_relu, has_wnext=has_wnext,
                               mm_dtype=mm_dtype, exact_recip=exact_recip)

    in_specs = [
        pl.BlockSpec((tile, LANE), lambda i, j: (i, 0)),     # P, destination rows
        pl.BlockSpec((tile, LANE), lambda i, j: (j, 0)),     # P, source rows
        pl.BlockSpec((tile, tile), lambda i, j: (i, j)),     # bf16 mask tile
        pl.BlockSpec((1, LANE), lambda i, j: (0, 0)),        # padded bias
    ]
    inputs = [p, p, mask_bf16, bias_pad]
    if has_wnext:
        in_specs.append(pl.BlockSpec((LANE, LANE), lambda i, j: (0, 0)))
        inputs.append(wnext)

    # Explicit scoped-VMEM budget (double-buffered blocks + scratch + headroom).
    blk = tile * LANE * 4
    vmem_est = (4 * blk                       # p_dst + p_src, double-buffered
                + 2 * tile * tile * 2         # mask bf16, double-buffered
                + 2 * blk                     # output
                + heads * tile * LANE * 4     # accumulator scratch (lane padded)
                + 6 * tile * tile * 4)        # transient e / p slabs
    vmem_limit = int(min(64 << 20, max(16 << 20, 2 * vmem_est)))

    flops = 2 * n_pad * n_pad * heads * cdim + (2 * n_pad * LANE * LANE if has_wnext else 0)
    bytes_accessed = (mask_bf16.size * 2 + 2 * p.size * 4 + n_pad * LANE * 4)

    return pl.pallas_call(
        kernel,
        out_shape=jax.ShapeDtypeStruct((n_pad, LANE), jnp.float32),
        grid_spec=pltpu.PrefetchScalarGridSpec(
            num_scalar_prefetch=0,
            grid=grid,
            in_specs=in_specs,
            out_specs=pl.BlockSpec((tile, LANE), lambda i, j: (i, 0)),
            scratch_shapes=[pltpu.VMEM((tile, heads), jnp.float32),        # running max
                            pltpu.VMEM((tile, heads), jnp.float32),        # running sum
                            pltpu.VMEM((heads, tile, cdim), jnp.float32)]  # accumulator
        ),
        compiler_params=pltpu.CompilerParams(
            dimension_semantics=("parallel", "arbitrary"),   # dst rows split across TCs
            vmem_limit_bytes=vmem_limit),
        cost_estimate=pl.CostEstimate(flops=int(flops),
                                      transcendentals=int(n_pad * n_pad * heads),
                                      bytes_accessed=int(bytes_accessed)),
    )(*inputs)


# ----------------------------------------------------------------------------
# Wrapper: full GAT forward
# ----------------------------------------------------------------------------
def gat_forward(params, x, mask_bias_bf16, *, use_bf16=True):
    """mask_bias_bf16: (n_pad, n_pad) bf16 additive log-multiplicity mask."""
    n = x.shape[0]
    n_pad = mask_bias_bf16.shape[0]
    assert mask_bias_bf16.shape[1] == n_pad and n_pad % LANE == 0
    tile = max(t for t in (512, 256, 128) if n_pad % t == 0)
    # NOTE: on v5e with tiny graphs, use_bf16=False avoids pure-overhead casts.
    mm_dtype = jnp.bfloat16 if use_bf16 else jnp.float32

    x_pad = jnp.zeros((n_pad, LANE), jnp.float32)
    x_pad = x_pad.at[:n, :x.shape[1]].set(x.astype(jnp.float32))

    p = _proj_call(x_pad, params[0]["wcat"], tile, mm_dtype)       # [xw | alphas] layer 0
    for li, layer in enumerate(params):
        last = li == len(params) - 1
        wnext = None if last else params[li + 1]["wcat"]
        p = _attn_call(p, mask_bias_bf16, layer["bias_pad"], wnext,
                       heads=layer["heads"], cdim=layer["head_dim"],
                       concat=layer["concat"], apply_relu=layer["apply_relu"],
                       tile=tile, mm_dtype=mm_dtype, exact_recip=last)

    lp = params[-1]
    out_dim = lp["heads"] * lp["head_dim"] if lp["concat"] else lp["head_dim"]
    return p[:n, :out_dim]


# ----------------------------------------------------------------------------
# Parameter init (deterministic, glorot-style) and graph preprocessing
# ----------------------------------------------------------------------------
def _glorot(key, shape):
    fan_in, fan_out = shape[-2], shape[-1]
    limit = (6.0 / (fan_in + fan_out)) ** 0.5
    return jax.random.uniform(key, shape, jnp.float32, -limit, limit)


def build_wcat(w, att_src, att_dst):
    """128x128 padded [W | W @ att_cat]: columns 0:HC = xw, HC:HC+H = alpha_src,
    HC+H:HC+2H = alpha_dst.  Folds the attention-logit matmul into W (associativity)."""
    f_in, hc = w.shape
    heads, cdim = att_src.shape
    assert f_in <= LANE and hc + 2 * heads <= LANE
    att_cat = jnp.zeros((hc, 2 * heads), jnp.float32)
    for h in range(heads):
        att_cat = att_cat.at[h * cdim:(h + 1) * cdim, h].set(att_src[h])
        att_cat = att_cat.at[h * cdim:(h + 1) * cdim, heads + h].set(att_dst[h])
    w_att = w @ att_cat                                            # (f_in, 2H)
    wcat = jnp.zeros((LANE, LANE), jnp.float32)
    wcat = wcat.at[:f_in, :hc].set(w)
    wcat = wcat.at[:f_in, hc:hc + 2 * heads].set(w_att)
    return wcat


def init_gat_params(key, in_channels, hidden_channels, out_channels,
                    num_layers, heads):
    params = []
    dims_in = [in_channels] + [hidden_channels * heads] * (num_layers - 1)
    for layer in range(num_layers):
        last = layer == num_layers - 1
        h = 1 if last else heads
        c = out_channels if last else hidden_channels
        concat = not last
        width = h * c if concat else c
        key, k1, k2, k3, k4 = jax.random.split(key, 5)
        w = _glorot(k1, (dims_in[layer], h * c))
        att_src = _glorot(k2, (h, c))
        att_dst = _glorot(k3, (h, c))
        bias = 0.1 * jax.random.normal(k4, (1, width), jnp.float32)
        bias_pad = jnp.zeros((1, LANE), jnp.float32).at[:, :width].set(bias)
        params.append(dict(wcat=build_wcat(w, att_src, att_dst),
                           bias=bias, bias_pad=bias_pad,
                           heads=h, head_dim=c, concat=concat,
                           apply_relu=not last))
    return params


def build_mask_bias(edge_index, num_nodes, num_padded):
    """Additive softmax bias over padded nodes: log(edge multiplicity) per (dst, src),
    -1e30 where no edge.  Matches PyG GATConv: existing self loops removed, exactly
    one self loop per node added (also for padding rows, keeping every row finite)."""
    src, dst = edge_index[0], edge_index[1]
    non_self = (src != dst).astype(jnp.float32)
    counts = jnp.zeros((num_padded, num_padded), jnp.float32)
    counts = counts.at[dst, src].add(non_self)                     # multiplicity
    diag = jnp.arange(num_padded)
    counts = counts.at[diag, diag].set(1.0)                        # fresh self loops
    return jnp.where(counts > 0,
                     jnp.log(jnp.maximum(counts, 1e-30)),
                     NEG_INF)


# ----------------------------------------------------------------------------
# Pure-JAX references for correctness checks
# ----------------------------------------------------------------------------
def gat_forward_ref(params, x, mask_bias, *, use_bf16):
    mm_dtype = jnp.bfloat16 if use_bf16 else jnp.float32

    def mm(a, b):
        return jnp.dot(a.astype(mm_dtype), b.astype(mm_dtype),
                       preferred_element_type=jnp.float32)

    x = x.astype(jnp.float32)
    for p in params:
        heads, cdim = p["heads"], p["head_dim"]
        hc = heads * cdim
        f_in = x.shape[1]
        proj = mm(x, p["wcat"][:f_in, :hc + 2 * heads])            # [xw | a_src | a_dst]
        xw = proj[:, :hc]
        a_src = proj[:, hc:hc + heads]
        a_dst = proj[:, hc + heads:hc + 2 * heads]
        outs = []
        for h in range(heads):
            e = a_dst[:, h:h + 1] + a_src[:, h:h + 1].T
            e = jnp.where(e >= 0, e, LEAKY_SLOPE * e) + mask_bias
            e = e - jnp.max(e, axis=-1, keepdims=True)
            pe = jnp.exp(e)
            a = pe / jnp.sum(pe, axis=-1, keepdims=True)
            outs.append(mm(a, xw[:, h * cdim:(h + 1) * cdim]))
        if p["concat"]:
            y = outs[0] if heads == 1 else jnp.concatenate(outs, axis=-1)
        else:
            y = sum(outs) / heads
        y = y + p["bias"]
        if p["apply_relu"]:
            y = jnp.maximum(y, 0.0)
        x = y
    return x


# ----------------------------------------------------------------------------
if __name__ == "__main__":
    # Model config: GAT(hidden_channels=32, num_layers=3, in_channels=16,
    #                   out_channels=8, heads=2)
    hidden_channels = 32
    num_layers = 3
    in_channels = 16
    out_channels = 8
    heads = 2

    num_nodes = 16
    num_edges = 40

    key = jax.random.PRNGKey(0)
    k_x, k_e1, k_e2, k_p = jax.random.split(key, 4)

    x = jax.random.normal(k_x, (num_nodes, in_channels), jnp.float32)
    src = jax.random.randint(k_e1, (num_edges,), 0, num_nodes)
    dst = jax.random.randint(k_e2, (num_edges,), 0, num_nodes)
    edge_index = jnp.stack([src, dst], axis=0)                     # COO [source; target]

    n_pad = _round_up(num_nodes, LANE)
    mask_f32 = build_mask_bias(edge_index, num_nodes, n_pad)
    mask_bf16 = mask_f32.astype(jnp.bfloat16)                      # bf16 O(N^2) operand

    params = init_gat_params(k_p, in_channels, hidden_channels, out_channels,
                             num_layers, heads)

    out = gat_forward(params, x, mask_bf16, use_bf16=True)
    out = jax.block_until_ready(out)
    assert out.shape == (num_nodes, out_channels)

    # Tight check: reference with the same bf16 matmul boundaries and the same
    # bf16-rounded mask values.
    mask_tight = mask_bf16[:num_nodes, :num_nodes].astype(jnp.float32)
    ref_bf16 = gat_forward_ref(params, x, mask_tight, use_bf16=True)
    assert jnp.allclose(out, ref_bf16, rtol=2e-2, atol=2e-2), "mismatch vs bf16 reference"

    # Loose sanity check: full-f32 reference (original module math).
    ref_f32 = gat_forward_ref(params, x, mask_f32[:num_nodes, :num_nodes], use_bf16=False)
    assert jnp.allclose(out, ref_f32, rtol=0.15, atol=0.15), "mismatch vs f32 reference"

    print("KERNEL_OK")
</pallas_src>

<mosaic_0001>
module attributes {stable_mosaic.version = 11 : i64} {
  func.func @_proj_kernel(%arg0: i32, %arg1: memref<128x128xf32, #tpu.memory_space<vmem>>, %arg2: memref<128x128xf32, #tpu.memory_space<vmem>>, %arg3: memref<128x128xf32, #tpu.memory_space<vmem>>) attributes {dimension_semantics = [#tpu.dimension_semantics<parallel>], iteration_bounds = array<i64: 1>, scalar_prefetch = 0 : i64, scratch_operands = 0 : i64, tpu.core_type = #tpu.core_type<tc>, window_params = [{transform_indices = @transform_0, window_bounds = array<i64: 128, 128>}, {pipeline_mode = #tpu.pipeline_mode<synchronous>, transform_indices = @transform_1, window_bounds = array<i64: 128, 128>}, {transform_indices = @transform_2, window_bounds = array<i64: 128, 128>}]} {
    %c0 = arith.constant 0 : index
    %c0_0 = arith.constant 0 : index
    %0 = vector.load %arg1[%c0, %c0_0] : memref<128x128xf32, #tpu.memory_space<vmem>>, vector<128x128xf32>
    %1 = arith.truncf %0 : vector<128x128xf32> to vector<128x128xbf16>
    %c0_1 = arith.constant 0 : index
    %c0_2 = arith.constant 0 : index
    %2 = vector.load %arg2[%c0_1, %c0_2] : memref<128x128xf32, #tpu.memory_space<vmem>>, vector<128x128xf32>
    %3 = arith.truncf %2 : vector<128x128xf32> to vector<128x128xbf16>
    %cst = arith.constant dense<0.000000e+00> : vector<128x128xf32>
    %4 = tpu.matmul %1, %3, %cst {dimension_numbers = #tpu.dot_dimension_numbers<[1], [0], [0], [1], [0, 0, 1, 1], [], []>} : vector<128x128xbf16>, vector<128x128xbf16>, vector<128x128xf32> -> vector<128x128xf32>
    %c0_3 = arith.constant 0 : index
    %c0_4 = arith.constant 0 : index
    %5 = vector.load %arg3[%c0_3, %c0_4] : memref<128x128xf32, #tpu.memory_space<vmem>>, vector<128x128xf32>
    tpu.vector_store %arg3[%c0_3, %c0_4], %4 {strides = array<i32>} : memref<128x128xf32, #tpu.memory_space<vmem>>, vector<128x128xf32>,
    return
  }
  func.func @transform_0(%arg0: i32) -> (i32, i32) {
    %c0_i32 = arith.constant 0 : i32
    %c0_i32_0 = arith.constant 0 : i32
    return %arg0, %c0_i32 : i32, i32
  }
  func.func @transform_1(%arg0: i32) -> (i32, i32) {
    %c0_i32 = arith.constant 0 : i32
    %c0_i32_0 = arith.constant 0 : i32
    %c0_i32_1 = arith.constant 0 : i32
    return %c0_i32, %c0_i32_0 : i32, i32
  }
  func.func @transform_2(%arg0: i32) -> (i32, i32) {
    %c0_i32 = arith.constant 0 : i32
    %c0_i32_0 = arith.constant 0 : i32
    return %arg0, %c0_i32 : i32, i32
  }
}

</mosaic_0001>

<llo_original>
// kernel: tpu_custom_call.1
$region0: #{tpu_custom_call.1}
  #allocation0 [shape = 'u32[]', space=smem, size = 0x4, offset = 0x4, fixed_abs, tag = 'smem constant byte address 0x4 - core index']
  #allocation1 [shape = 'u32[144,128]{1,0:T(1,128)}', space=vmem, size = 0x12000, scoped, tag = 'internal scratch']
  %s0 = inlined_call_operand.hbm [shape: f32[128,128], index: 0, kind: input, shape index: {}]
  %s1 = inlined_call_operand.hbm [shape: f32[128,128], index: 1, kind: input, shape index: {}]
  %s2 = inlined_call_operand.hbm [shape: f32[128,128], index: 2, kind: output, shape index: {}]
  %s3 = sld [smem:[#allocation0]]
  $region26: #{tpu_custom_call.1} parent=0
    _
  %s5 = ssub.s32 1, %s3
  %s6 = scalar_select 0, %s5, %s3
  $region1: #{tpu_custom_call.1} parent=0
    #allocation2 [shape = 'u8[65536]{0}', space=vmem, size = 0x10000, scoped, tag = 'input window, operand 0, single buffered']
    #allocation3 [shape = 's32[1]{0}', space=sflag, size = 0x4, scoped, tag = 'scoped memory for tpu_custom_call.1']
    #allocation4 [shape = 's32[1]{0}', space=sflag, size = 0x4, scoped, tag = 'scoped memory for tpu_custom_call.1']
    #allocation5 [shape = 'u8[65536]{0}', space=vmem, size = 0x10000, scoped, tag = 'input window, operand 1, single buffered']
    #allocation6 [shape = 's32[1]{0}', space=sflag, size = 0x4, scoped, tag = 'scoped memory for tpu_custom_call.1']
    #allocation7 [shape = 'u8[65536]{0}', space=vmem, size = 0x10000, scoped, tag = 'output window, operand 0, single buffered']
    %7 = vsyncpa [#allocation3], 0
    %8 = vsyncpa [#allocation6], 0
    %9 = vsyncpa [#allocation4], 0
    // Predicated region
    $region2: #{tpu_custom_call.1} parent=1 // pred_check
      _
    $region3: #{tpu_custom_call.1} parent=1 // pred_check_branch
      %11 = sbr.rel (0) target = $region5
    $region4: #{tpu_custom_call.1} parent=1 // pred_region
      %s13 = ssub.s32 2048, 2048
      %14 = vsyncadd [#allocation3], %s13
      %s15 = sshll.u32 [#allocation2], 4
      %s16 = int_to_ptr.vmem [resolvable:$true] %s15
      %21 = dma.hbm_to_vmem [thread:$0]  %s0, 2048, %s16, [#allocation3], 128, 128, 8
    $region5: #{tpu_custom_call.1} parent=1 // pred_fallthru
      _
    // Predicated region
    $region6: #{tpu_custom_call.1} parent=1 // pred_check
      _
    $region7: #{tpu_custom_call.1} parent=1 // pred_check_branch
      %23 = sbr.rel (0) target = $region9
    $region8: #{tpu_custom_call.1} parent=1 // pred_region
      %s25 = ssub.s32 2048, 2048
      %26 = vsyncadd [#allocation6], %s25
      %s27 = sshll.u32 [#allocation5], 4
      %s28 = int_to_ptr.vmem [resolvable:$true] %s27
      %33 = dma.hbm_to_vmem [thread:$0]  %s1, 2048, %s28, [#allocation6], 128, 128, 8
    $region9: #{tpu_custom_call.1} parent=1 // pred_fallthru
      _
    // Predicated region
    $region10: #{tpu_custom_call.1} parent=1 // pred_check
      _
    $region11: #{tpu_custom_call.1} parent=1 // pred_check_branch
      %35 = sbr.rel (0) target = $region13
    $region12: #{tpu_custom_call.1} parent=1 // pred_region
      %36 = dma.done [#allocation3], 2048
    $region13: #{tpu_custom_call.1} parent=1 // pred_fallthru
      _
    // Predicated region
    $region14: #{tpu_custom_call.1} parent=1 // pred_check
      _
    $region15: #{tpu_custom_call.1} parent=1 // pred_check_branch
      %38 = sbr.rel (0) target = $region17
    $region16: #{tpu_custom_call.1} parent=1 // pred_region
      %39 = dma.done [#allocation6], 2048
    $region17: #{tpu_custom_call.1} parent=1 // pred_fallthru
      _
    %v41 = vld [vmem:[#allocation2] sm:$0xff]
    %v42 = vld [vmem:[#allocation2 + $0x8] sm:$0xff]
    %v43 = vld [vmem:[#allocation2 + $0x10] sm:$0xff]
    %v44 = vld [vmem:[#allocation2 + $0x18] sm:$0xff]
    %v45 = vld [vmem:[#allocation2 + $0x20] sm:$0xff]
    %v46 = vld [vmem:[#allocation2 + $0x28] sm:$0xff]
    %v47 = vld [vmem:[#allocation2 + $0x30] sm:$0xff]
    %v48 = vld [vmem:[#allocation2 + $0x38] sm:$0xff]
    %v49 = vld [vmem:[#allocation2 + $0x40] sm:$0xff]
    %v50 = vld [vmem:[#allocation2 + $0x48] sm:$0xff]
    %v51 = vld [vmem:[#allocation2 + $0x50] sm:$0xff]
    %v52 = vld [vmem:[#allocation2 + $0x58] sm:$0xff]
    %v53 = vld [vmem:[#allocation2 + $0x60] sm:$0xff]
    %v54 = vld [vmem:[#allocation2 + $0x68] sm:$0xff]
    %v55 = vld [vmem:[#allocation2 + $0x70] sm:$0xff]
    %v56 = vld [vmem:[#allocation2 + $0x78] sm:$0xff]
    %v57 = vpack.c.bf16 %v42, %v41
    %v58 = vpack.c.bf16 %v44, %v43
    %v59 = vpack.c.bf16 %v46, %v45
    %v60 = vpack.c.bf16 %v48, %v47
    %v61 = vpack.c.bf16 %v50, %v49
    %v62 = vpack.c.bf16 %v52, %v51
    %v63 = vpack.c.bf16 %v54, %v53
    %v64 = vpack.c.bf16 %v56, %v55
    %v65 = vld [vmem:[#allocation5] sm:$0xff]
    %v66 = vld [vmem:[#allocation5 + $0x8] sm:$0xff]
    %v67 = vld [vmem:[#allocation5 + $0x10] sm:$0xff]
    %v68 = vld [vmem:[#allocation5 + $0x18] sm:$0xff]
    %v69 = vld [vmem:[#allocation5 + $0x20] sm:$0xff]
    %v70 = vld [vmem:[#allocation5 + $0x28] sm:$0xff]
    %v71 = vld [vmem:[#allocation5 + $0x30] sm:$0xff]
    %v72 = vld [vmem:[#allocation5 + $0x38] sm:$0xff]
    %v73 = vld [vmem:[#allocation5 + $0x40] sm:$0xff]
    %v74 = vld [vmem:[#allocation5 + $0x48] sm:$0xff]
    %v75 = vld [vmem:[#allocation5 + $0x50] sm:$0xff]
    %v76 = vld [vmem:[#allocation5 + $0x58] sm:$0xff]
    %v77 = vld [vmem:[#allocation5 + $0x60] sm:$0xff]
    %v78 = vld [vmem:[#allocation5 + $0x68] sm:$0xff]
    %v79 = vld [vmem:[#allocation5 + $0x70] sm:$0xff]
    %v80 = vld [vmem:[#allocation5 + $0x78] sm:$0xff]
    %v81 = vpack.c.bf16 %v66, %v65
    %v82 = vpack.c.bf16 %v68, %v67
    %v83 = vpack.c.bf16 %v70, %v69
    %v84 = vpack.c.bf16 %v72, %v71
    %v85 = vpack.c.bf16 %v74, %v73
    %v86 = vpack.c.bf16 %v76, %v75
    %v87 = vpack.c.bf16 %v78, %v77
    %v88 = vpack.c.bf16 %v80, %v79
    %89 = vmatprep.subr.bf16.mxu0 0
    %90 = vmatpush1.bf16.msra.mxu0 %v81
    %91 = vmatprep.subr.bf16.mxu0 0
    %92 = vmatpush1.bf16.msra.mxu0 %v82
    %93 = vmatprep.subr.bf16.mxu0 0
    %94 = vmatpush1.bf16.msra.mxu0 %v83
    %95 = vmatprep.subr.bf16.mxu0 0
    %96 = vmatpush1.bf16.msra.mxu0 %v84
    %97 = vmatprep.subr.bf16.mxu0 0
    %98 = vmatpush1.bf16.msra.mxu0 %v85
    %99 = vmatprep.subr.bf16.mxu0 0
    %100 = vmatpush1.bf16.msra.mxu0 %v86
    %101 = vmatprep.subr.bf16.mxu0 0
    %102 = vmatpush1.bf16.msra.mxu0 %v87
    %103 = vmatprep.subr.bf16.mxu0 0
    %104 = vmatpush1.bf16.msra.mxu0 %v88
    %105 = vmatprep.subr.bf16.mxu0 0
    %106 = vmatpush1.bf16.msra.mxu0 0
    %107 = vmatprep.subr.bf16.mxu0 0
    %108 = vmatpush1.bf16.msra.mxu0 0
    %109 = vmatprep.subr.bf16.mxu0 0
    %110 = vmatpush1.bf16.msra.mxu0 0
    %111 = vmatprep.subr.bf16.mxu0 0
    %112 = vmatpush1.bf16.msra.mxu0 0
    %113 = vmatprep.subr.bf16.mxu0 0
    %114 = vmatpush1.bf16.msra.mxu0 0
    %115 = vmatprep.subr.bf16.mxu0 0
    %116 = vmatpush1.bf16.msra.mxu0 0
    %117 = vmatprep.subr.bf16.mxu0 0
    %118 = vmatpush1.bf16.msra.mxu0 0
    %119 = vmatprep.subr.bf16.mxu0 0
    %120 = vmatpush1.bf16.msra.mxu0 0
    %121 = vmatprep.mubr.bf16.mxu0 0
    %122 = vmatmul.mubr.bf16.gmra.mrb[0].mxu0 %v57
    %v123 = vpop.f32.mrb[0].mxu0
    %v124 = vadd.f32 0.0, %v123
    %v125 = vpop.f32.mrb[0].mxu0
    %v126 = vpop.f32.mrb[0].mxu0
    %v127 = vadd.f32 0.0, %v126
    %v128 = vpop.f32.mrb[0].mxu0
    %129 = vmatprep.mubr.bf16.mxu0 0
    %130 = vmatmul.mubr.bf16.gmra.mrb[0].mxu0 %v58
    %v131 = vpop.f32.mrb[0].mxu0
    %v132 = vadd.f32 0.0, %v131
    %v133 = vpop.f32.mrb[0].mxu0
    %v134 = vpop.f32.mrb[0].mxu0
    %v135 = vadd.f32 0.0, %v134
    %v136 = vpop.f32.mrb[0].mxu0
    %137 = vmatprep.mubr.bf16.mxu0 0
    %138 = vmatmul.mubr.bf16.gmra.mrb[0].mxu0 %v59
    %v139 = vpop.f32.mrb[0].mxu0
    %v140 = vadd.f32 0.0, %v139
    %v141 = vpop.f32.mrb[0].mxu0
    %v142 = vpop.f32.mrb[0].mxu0
    %v143 = vadd.f32 0.0, %v142
    %v144 = vpop.f32.mrb[0].mxu0
    %145 = vmatprep.mubr.bf16.mxu0 0
    %146 = vmatmul.mubr.bf16.gmra.mrb[0].mxu0 %v60
    %v147 = vpop.f32.mrb[0].mxu0
    %v148 = vadd.f32 0.0, %v147
    %v149 = vpop.f32.mrb[0].mxu0
    %v150 = vpop.f32.mrb[0].mxu0
    %v151 = vadd.f32 0.0, %v150
    %v152 = vpop.f32.mrb[0].mxu0
    %153 = vmatprep.mubr.bf16.mxu0 0
    %154 = vmatmul.mubr.bf16.gmra.mrb[0].mxu0 %v61
    %v155 = vpop.f32.mrb[0].mxu0
    %v156 = vadd.f32 0.0, %v155
    %v157 = vpop.f32.mrb[0].mxu0
    %v158 = vpop.f32.mrb[0].mxu0
    %v159 = vadd.f32 0.0, %v158
    %v160 = vpop.f32.mrb[0].mxu0
    %161 = vmatprep.mubr.bf16.mxu0 0
    %162 = vmatmul.mubr.bf16.gmra.mrb[0].mxu0 %v62
    %v163 = vpop.f32.mrb[0].mxu0
    %v164 = vadd.f32 0.0, %v163
    %v165 = vpop.f32.mrb[0].mxu0
    %v166 = vpop.f32.mrb[0].mxu0
    %v167 = vadd.f32 0.0, %v166
    %v168 = vpop.f32.mrb[0].mxu0
    %169 = vmatprep.mubr.bf16.mxu0 0
    %170 = vmatmul.mubr.bf16.gmra.mrb[0].mxu0 %v63
    %v171 = vpop.f32.mrb[0].mxu0
    %v172 = vadd.f32 0.0, %v171
    %v173 = vpop.f32.mrb[0].mxu0
    %v174 = vpop.f32.mrb[0].mxu0
    %v175 = vadd.f32 0.0, %v174
    %v176 = vpop.f32.mrb[0].mxu0
    %177 = vmatprep.mubr.bf16.mxu0 0
    %178 = vmatmul.mubr.bf16.gmra.mrb[0].mxu0 %v64
    %v179 = vpop.f32.mrb[0].mxu0
    %v180 = vadd.f32 0.0, %v179
    %v181 = vpop.f32.mrb[0].mxu0
    %v182 = vpop.f32.mrb[0].mxu0
    %v183 = vadd.f32 0.0, %v182
    %v184 = vpop.f32.mrb[0].mxu0
    %185 = vdwg.mxu0
    %186 = vst [vmem:[#allocation7] sm:$0xff] %v124
    %187 = vst [vmem:[#allocation7 + $0x8] sm:$0xff] %v127
    %188 = vst [vmem:[#allocation7 + $0x10] sm:$0xff] %v132
    %189 = vst [vmem:[#allocation7 + $0x18] sm:$0xff] %v135
    %190 = vst [vmem:[#allocation7 + $0x20] sm:$0xff] %v140
    %191 = vst [vmem:[#allocation7 + $0x28] sm:$0xff] %v143
    %192 = vst [vmem:[#allocation7 + $0x30] sm:$0xff] %v148
    %193 = vst [vmem:[#allocation7 + $0x38] sm:$0xff] %v151
    %194 = vst [vmem:[#allocation7 + $0x40] sm:$0xff] %v156
    %195 = vst [vmem:[#allocation7 + $0x48] sm:$0xff] %v159
    %196 = vst [vmem:[#allocation7 + $0x50] sm:$0xff] %v164
    %197 = vst [vmem:[#allocation7 + $0x58] sm:$0xff] %v167
    %198 = vst [vmem:[#allocation7 + $0x60] sm:$0xff] %v172
    %199 = vst [vmem:[#allocation7 + $0x68] sm:$0xff] %v175
    %200 = vst [vmem:[#allocation7 + $0x70] sm:$0xff] %v180
    %201 = vst [vmem:[#allocation7 + $0x78] sm:$0xff] %v183
    // Predicated region
    $region18: #{tpu_custom_call.1} parent=1 // pred_check
      _
    $region19: #{tpu_custom_call.1} parent=1 // pred_check_branch
      %203 = sbr.rel (0) target = $region21
    $region20: #{tpu_custom_call.1} parent=1 // pred_region
      %s205 = ssub.s32 2048, 2048
      %206 = vsyncadd [#allocation4], %s205
      %s207 = sshll.u32 [#allocation7], 4
      %s208 = int_to_ptr.vmem [resolvable:$true] %s207
      %213 = dma.vmem_to_hbm [thread:$0]  %s208, 2048, %s2, [#allocation4], 128, 128, 8
    $region21: #{tpu_custom_call.1} parent=1 // pred_fallthru
      _
    // Predicated region
    $region22: #{tpu_custom_call.1} parent=1 // pred_check
      _
    $region23: #{tpu_custom_call.1} parent=1 // pred_check_branch
      %215 = sbr.rel (0) target = $region25
    $region24: #{tpu_custom_call.1} parent=1 // pred_region
      %216 = dma.done [#allocation4], 2048
    $region25: #{tpu_custom_call.1} parent=1 // pred_fallthru
      _
    %217 = vsyncpa [#allocation3], 1
    %218 = vsyncpa [#allocation6], 1
    %219 = vsyncpa [#allocation4], 1

</llo_original>
